<compile_context>
chip_gen: v6e
topology: v6e:2x2x1
jax: 0.10.0
libtpu: 0.0.40
codegen_flags: <defaults>
</compile_context>

<pallas_src>
import jax
import jax.numpy as jnp
import numpy as np
from jax.experimental import pallas as pl
from jax.experimental.pallas import tpu as pltpu


def _cov_kernel(x_ref, o_ref):
    """x_ref: (W, stride, D) window block; o_ref: (W, D, D) covariances."""
    s = x_ref.shape[1]
    x = x_ref[...].astype(jnp.float32)                  # (W, S, D)
    mean = jnp.mean(x, axis=1, keepdims=True)           # (W, 1, D), f32
    xc = x - mean                                       # centered, f32
    if x_ref.dtype == jnp.bfloat16:
        # bf16-native MXU path on v6e/v7x; centering stays in f32.
        xc = xc.astype(jnp.bfloat16)
    # einsum('wsd,wse->wde'): batch over W, contract the stride axis directly
    # (no explicit transpose / XLU pass before the MXU).
    cov = jax.lax.dot_general(
        xc, xc,
        dimension_numbers=(((1,), (1,)), ((0,), (0,))),
        preferred_element_type=jnp.float32,
    ) * (1.0 / (s - 1))
    o_ref[...] = cov.astype(o_ref.dtype)


def _pick_windows_per_block(batch, n_win, stride, D, in_itemsize,
                            budget_bytes=6 << 20):
    """Largest divisor of n_win whose (input + output) block fits the budget.

    Prefers keeping >= 2 total grid steps so v7x's two TensorCores both get
    shards via dimension_semantics-based megacore sharding.
    """
    per_win = stride * D * in_itemsize + D * D * 4      # input + f32 output
    divisors = [w for w in range(1, n_win + 1) if n_win % w == 0]
    fitting = [w for w in divisors if w * per_win <= budget_bytes] or [1]
    w = max(fitting)
    if batch * (n_win // w) < 2:
        alt = [d for d in fitting if batch * (n_win // d) >= 2]
        if alt:
            w = max(alt)
    return w


def covariance(feature, stride):
    """Equivalent of Covariance(stride).forward(feature) for (B, L, D) input."""
    B, L, D = feature.shape
    assert stride >= 2, "stride must be >= 2 (division by stride - 1)"
    assert L % stride == 0, "L must be divisible by stride"
    n_win = L // stride

    itemsize = jnp.dtype(feature.dtype).itemsize
    W = _pick_windows_per_block(B, n_win, stride, D, itemsize)

    # Free, contiguous reshape: a window becomes a native axis, so the kernel
    # never reshapes and the block dims (stride, D) equal the full array dims.
    x4 = feature.reshape(B, n_win, stride, D)

    in_block_bytes = W * stride * D * itemsize
    out_block_bytes = W * D * D * 4
    vmem_limit = min(
        max(2 * (in_block_bytes + out_block_bytes) + (8 << 20), 32 << 20),
        48 << 20)

    cov_full = pl.pallas_call(
        _cov_kernel,
        out_shape=jax.ShapeDtypeStruct((B, n_win, D, D), jnp.float32),
        grid=(B, n_win // W),
        in_specs=[pl.BlockSpec((pl.Squeezed(), W, stride, D),
                               lambda b, w: (b, w, 0, 0))],
        out_specs=pl.BlockSpec((pl.Squeezed(), W, D, D),
                               lambda b, w: (b, w, 0, 0)),
        compiler_params=pltpu.CompilerParams(
            dimension_semantics=("parallel", "parallel"),
            vmem_limit_bytes=vmem_limit),
    )(x4)

    # Strict lower triangle in row-major order == torch.masked_select with
    # lower_mask[i+1:, i] = 1. Single flat gather on the (D*D) axis.
    rows, cols = np.tril_indices(D, k=-1)
    flat_idx = jnp.asarray(rows * D + cols, dtype=jnp.int32)
    cov_flat = cov_full.reshape(B, n_win, D * D)
    return jnp.take(cov_flat, flat_idx, axis=-1)


def _covariance_ref_numpy(feature, stride):
    """Pure numpy reference mirroring the PyTorch forward exactly."""
    f = np.asarray(feature, dtype=np.float32)
    B, L, D = f.shape
    means = f.reshape(B, L // stride, stride, D).mean(axis=2)      # avg_pool2d
    means_b = np.repeat(means, stride, axis=1)                     # repeat_interleave
    ms = (f - means_b).reshape(-1, stride, D)
    cov = np.einsum("ijk,ijm->ikm", ms, ms) / (stride - 1)
    rows, cols = np.tril_indices(D, k=-1)
    return cov[:, rows, cols].reshape(B, L // stride, -1)


if __name__ == "__main__":
    B, L, D = 2, 16, 8
    stride = 8

    key = jax.random.PRNGKey(0)
    feature = jax.random.normal(key, (B, L, D), dtype=jnp.float32)

    out = covariance(feature, stride)
    out = jax.block_until_ready(out)

    ref = _covariance_ref_numpy(np.asarray(feature), stride)
    assert out.shape == (B, L // stride, D * (D - 1) // 2), out.shape
    np.testing.assert_allclose(np.asarray(out), ref, rtol=1e-5, atol=1e-5)

    print("KERNEL_OK")
</pallas_src>

<mosaic_0001>
module attributes {stable_mosaic.version = 11 : i64} {
  func.func @_cov_kernel(%arg0: i32, %arg1: i32, %arg2: memref<1x2x8x8xf32, #tpu.memory_space<vmem>>, %arg3: memref<1x2x8x8xf32, #tpu.memory_space<vmem>>) attributes {dimension_semantics = [#tpu.dimension_semantics<parallel>, #tpu.dimension_semantics<parallel>], iteration_bounds = array<i64: 2, 1>, scalar_prefetch = 0 : i64, scratch_operands = 0 : i64, tpu.core_type = #tpu.core_type<tc>, window_params = [{transform_indices = @transform_0, window_bounds = array<i64: 1, 2, 8, 8>}, {transform_indices = @transform_1, window_bounds = array<i64: 1, 2, 8, 8>}]} {
    %c0 = arith.constant 0 : index
    %c0_0 = arith.constant 0 : index
    %c0_1 = arith.constant 0 : index
    %c0_2 = arith.constant 0 : index
    %0 = vector.load %arg2[%c0, %c0_0, %c0_1, %c0_2] : memref<1x2x8x8xf32, #tpu.memory_space<vmem>>, vector<1x2x8x8xf32>
    %1 = vector.shape_cast %0 : vector<1x2x8x8xf32> to vector<2x8x8xf32>
    %cst = arith.constant dense<0.000000e+00> : vector<2x8xf32>
    %2 = vector.multi_reduction <add>, %1, %cst [1] : vector<2x8x8xf32> to vector<2x8xf32>
    %3 = vector.shape_cast %2 : vector<2x8xf32> to vector<2x1x8xf32>
    %cst_3 = arith.constant 8.000000e+00 : f32
    %4 = vector.broadcast %cst_3 : f32 to vector<2x1x8xf32>
    %5 = arith.divf %3, %4 : vector<2x1x8xf32>
    %6 = vector.broadcast %5 : vector<2x1x8xf32> to vector<2x8x8xf32>
    %7 = arith.subf %1, %6 : vector<2x8x8xf32>
    %cst_4 = arith.constant dense<0.000000e+00> : vector<2x8x8xf32>
    %8 = tpu.matmul %7, %7, %cst_4 {dimension_numbers = #tpu.dot_dimension_numbers<[1], [1], [2], [2], [0, 0, 0, 2, 1, 2], [0], [0]>} : vector<2x8x8xf32>, vector<2x8x8xf32>, vector<2x8x8xf32> -> vector<2x8x8xf32>
    %cst_5 = arith.constant 0.142857149 : f32
    %9 = vector.broadcast %cst_5 : f32 to vector<2x8x8xf32>
    %10 = arith.mulf %8, %9 : vector<2x8x8xf32>
    %c0_6 = arith.constant 0 : index
    %c0_7 = arith.constant 0 : index
    %c0_8 = arith.constant 0 : index
    %c0_9 = arith.constant 0 : index
    %11 = vector.load %arg3[%c0_6, %c0_7, %c0_8, %c0_9] : memref<1x2x8x8xf32, #tpu.memory_space<vmem>>, vector<1x2x8x8xf32>
    %12 = vector.shape_cast %11 : vector<1x2x8x8xf32> to vector<2x8x8xf32>
    %13 = vector.shape_cast %10 : vector<2x8x8xf32> to vector<1x2x8x8xf32>
    tpu.vector_store %arg3[%c0_6, %c0_7, %c0_8, %c0_9], %13 {strides = array<i32>} : memref<1x2x8x8xf32, #tpu.memory_space<vmem>>, vector<1x2x8x8xf32>,
    return
  }
  func.func @transform_0(%arg0: i32, %arg1: i32) -> (i32, i32, i32, i32) {
    %c0_i32 = arith.constant 0 : i32
    %c0_i32_0 = arith.constant 0 : i32
    %c0_i32_1 = arith.constant 0 : i32
    return %arg0, %arg1, %c0_i32, %c0_i32_0 : i32, i32, i32, i32
  }
  func.func @transform_1(%arg0: i32, %arg1: i32) -> (i32, i32, i32, i32) {
    %c0_i32 = arith.constant 0 : i32
    %c0_i32_0 = arith.constant 0 : i32
    %c0_i32_1 = arith.constant 0 : i32
    return %arg0, %arg1, %c0_i32, %c0_i32_0 : i32, i32, i32, i32
  }
}

</mosaic_0001>

<llo_original>
// kernel: tpu_custom_call.1
$region0: #{tpu_custom_call.1}
  #allocation0 [shape = 'u32[]', space=smem, size = 0x4, offset = 0x4, fixed_abs, tag = 'smem constant byte address 0x4 - core index']
  #allocation1 [shape = 'u32[144,128]{1,0:T(1,128)}', space=vmem, size = 0x12000, scoped, tag = 'internal scratch']
  %s0 = inlined_call_operand.hbm [shape: f32[2,2,8,8], index: 0, kind: input, shape index: {}]
  %s1 = inlined_call_operand.hbm [shape: f32[2,2,8,8], index: 1, kind: output, shape index: {}]
  %s2 = sld [smem:[#allocation0]]
  $region41: #{tpu_custom_call.1} parent=0
    _
  %s4 = ssub.s32 1, %s2
  %s5 = scalar_select 0, %s4, %s2
  $region1: #{tpu_custom_call.1} parent=0
    #allocation2 [shape = 'u8[16384]{0}', space=vmem, size = 0x4000, scoped, tag = 'input window, operand 0']
    #allocation3 [shape = 's32[2]{0}', space=sflag, size = 0x8, scoped, tag = 'scoped memory for tpu_custom_call.1']
    #allocation4 [shape = 's32[2]{0}', space=sflag, size = 0x8, scoped, tag = 'scoped memory for tpu_custom_call.1']
    #allocation5 [shape = 'u8[16384]{0}', space=vmem, size = 0x4000, scoped, tag = 'output window, operand 0']
    %6 = vsyncpa [#allocation3], 0
    %s7 = scalar_lea.sflag [#allocation3], 1
    %8 = vsyncpa %s7, 0
    %9 = vsyncpa [#allocation4], 0
    %s10 = scalar_lea.sflag [#allocation4], 1
    %11 = vsyncpa %s10, 0
    loop: start=0, step=1, limit=4
    $region2: #{tpu_custom_call.1} parent=1 // loop_pre_header
      _
    $region3: #{tpu_custom_call.1} parent=1 // loop_header
      %s13 = sphi 0, %s17
      %p14 = scmp.ge.s32.totalorder %s13, 4
      %s20 = sphi 0, %s32
      %s21 = sphi 0, %s28
      %s22 = sphi 0, %s20
      %s23 = sphi 0, %s21
      %s24 = sphi 0, %s22
      %s25 = sphi 0, %s23
      %s37 = sphi 0, %s39
      %s40 = sphi 0, %s37
      %s41 = sphi 0, %s40
      %s57 = sphi 0, %s41
      %s65 = sphi 0, %s67
      %s68 = sphi 0, %s65
      %s69 = sphi 0, %s68
      %s85 = sphi 0, %s69
    $region4: #{tpu_custom_call.1} parent=1 // loop_header_branch
      %16 = sbr.rel (%p14) target = $region8
    $region5: #{tpu_custom_call.1} parent=1 // loop_body
      %s18 = ssub.s32 %s13, 1
      %s19 = ssub.s32 %s13, 2
      %s26 = sadd.s32 1, %s21
      %p27 = scmp.ge.s32.totalorder %s26, 1
      %s28 = scalar_select %p27, 0, %s26
      %s29 = sadd.s32 1, %s20
      %s30 = scalar_select %p27, %s29, %s20
      %p31 = scmp.ge.s32.totalorder %s30, 2
      %s32 = scalar_select %p31, 0, %s30
      %s33 = ssub.s32 %s20, %s32
      %s34 = ssub.s32 %s21, %s28
      %s35 = sor.u32 %s33, %s34
      %p36 = scmp.eq.s32.totalorder %s35, 0
      %s38 = sadd.s32 %s37, 1
      %s39 = scalar_select %p36, %s37, %s38
      %p42 = pneg %p36
      %p43 = scmp.eq.s32.totalorder %s13, 1
      %p44 = por %p42, %p43
      %p45 = scmp.ne.s32.totalorder %s37, %s40
      %p46 = scmp.eq.s32.totalorder %s13, 0
      %p47 = por %p45, %p46
      %p48 = scmp.ne.s32.totalorder %s37, %s40
      %p49 = scmp.eq.s32.totalorder %s18, 1
      %p50 = por %p48, %p49
      %p51 = scmp.ne.s32.totalorder %s40, %s41
      %p52 = scmp.eq.s32.totalorder %s18, 0
      %p53 = por %p51, %p52
      %p54 = scmp.ne.s32.totalorder %s40, %s41
      %p55 = scmp.eq.s32.totalorder %s19, 1
      %p56 = por %p54, %p55
      %p58 = scmp.ne.s32.totalorder %s41, %s57
      %p59 = scmp.eq.s32.totalorder %s19, 0
      %p60 = por %p58, %p59
      %s61 = ssub.s32 %s20, %s32
      %s62 = ssub.s32 %s21, %s28
      %s63 = sor.u32 %s61, %s62
      %p64 = scmp.eq.s32.totalorder %s63, 0
      %s66 = sadd.s32 %s65, 1
      %s67 = scalar_select %p64, %s65, %s66
      %p70 = pneg %p64
      %p71 = scmp.eq.s32.totalorder %s13, 1
      %p72 = por %p70, %p71
      %p73 = scmp.ne.s32.totalorder %s65, %s68
      %p74 = scmp.eq.s32.totalorder %s13, 0
      %p75 = por %p73, %p74
      %p76 = scmp.ne.s32.totalorder %s65, %s68
      %p77 = scmp.eq.s32.totalorder %s18, 1
      %p78 = por %p76, %p77
      %p79 = scmp.ne.s32.totalorder %s68, %s69
      %p80 = scmp.eq.s32.totalorder %s18, 0
      %p81 = por %p79, %p80
      %p82 = scmp.ne.s32.totalorder %s68, %s69
      %p83 = scmp.eq.s32.totalorder %s19, 1
      %p84 = por %p82, %p83
      %p86 = scmp.ne.s32.totalorder %s69, %s85
      %p87 = scmp.eq.s32.totalorder %s19, 0
      %p88 = por %p86, %p87
      %p89 = scmp.le.s32.totalorder 1, %s13
      %p90 = scmp.lt.s32.totalorder %s13, 3
      %p91 = pnand %p89, %p90
      %p92 = pneg %p91
      // Predicated region
      $region9: #{tpu_custom_call.1} parent=5 // pred_check
        _
      $region10: #{tpu_custom_call.1} parent=5 // pred_check_branch
        %94 = sbr.rel (%p91) target = $region12
      $region11: #{tpu_custom_call.1} parent=5 // pred_region
        %s95 = ssub.s32 %s13, 1
      $region12: #{tpu_custom_call.1} parent=5 // pred_fallthru
        _
      %p96 = scmp.lt.s32.totalorder %s13, 2
      // Predicated region
      $region13: #{tpu_custom_call.1} parent=5 // pred_check
        %p97 = pneg %p96
      $region14: #{tpu_custom_call.1} parent=5 // pred_check_branch
        %99 = sbr.rel (%p97) target = $region16
      $region15: #{tpu_custom_call.1} parent=5 // pred_region
        // Predicated region
        $region17: #{tpu_custom_call.1} parent=15 // pred_check
          %p100 = pneg %p47
        $region18: #{tpu_custom_call.1} parent=15 // pred_check_branch
          %102 = sbr.rel (%p100) target = $region20
        $region19: #{tpu_custom_call.1} parent=15 // pred_region
          %s103 = sand.u32 %s37, 1
          %s104 = scalar_lea.sflag [#allocation3], %s103
          %s105 = sand.u32 %s37, 1
          %s106 = smul.addr %s105, 16
          %s107 = scalar_lea.vmem [#allocation2], %s106
          %s108 = smul.u32 2, %s21
          %s110 = ssub.s32 256, 256
          %111 = vsyncadd %s104, %s110
          %s112 = smul.addr %s20, 2
          %s113 = sadd.s32 %s108, %s112
          %s114 = smul.addr %s113, 128
          %s115 = scalar_lea.hbm %s0, %s114
          %s116 = sshll.u32 %s107, 4
          %s117 = int_to_ptr.vmem [resolvable:$true] %s116
          %122 = dma.hbm_to_vmem [thread:$0]  %s115, 256, %s117, %s104, 128, 128, 8
        $region20: #{tpu_custom_call.1} parent=15 // pred_fallthru
          _
      $region16: #{tpu_custom_call.1} parent=5 // pred_fallthru
        _
      %p123 = scmp.le.s32.totalorder 1, %s13
      %p124 = scmp.lt.s32.totalorder %s13, 3
      %p125 = pnand %p123, %p124
      %p126 = pneg %p125
      // Predicated region
      $region21: #{tpu_custom_call.1} parent=5 // pred_check
        _
      $region22: #{tpu_custom_call.1} parent=5 // pred_check_branch
        %128 = sbr.rel (%p125) target = $region24
      $region23: #{tpu_custom_call.1} parent=5 // pred_region
        %s129 = ssub.s32 %s13, 1
        %s130 = sand.u32 %s40, 1
        %s131 = scalar_lea.sflag [#allocation3], %s130
        %s132 = sand.u32 %s40, 1
        %s133 = smul.addr %s132, 16
        %s134 = scalar_lea.vmem [#allocation2], %s133
        // Predicated region
        $region25: #{tpu_custom_call.1} parent=23 // pred_check
          %p135 = pneg %p53
        $region26: #{tpu_custom_call.1} parent=23 // pred_check_branch
          %137 = sbr.rel (%p135) target = $region28
        $region27: #{tpu_custom_call.1} parent=23 // pred_region
          %138 = dma.done %s131, 256
        $region28: #{tpu_custom_call.1} parent=23 // pred_fallthru
          _
        %s139 = sand.u32 %s40, 1
        %s140 = scalar_lea.sflag [#allocation3], %s139
        %s141 = sand.u32 %s40, 1
        %s142 = smul.addr %s141, 16
        %s143 = scalar_lea.vmem [#allocation2], %s142
        %p144 = pneg %p53
        %p145 = pneg %p50
        %p146 = pneg %p81
        %p147 = pneg %p78
        %s148 = sand.u32 %s68, 1
        %s149 = scalar_lea.sflag [#allocation4], %s148
        %s150 = sand.u32 %s68, 1
        %s151 = smul.addr %s150, 16
        %s152 = scalar_lea.vmem [#allocation5], %s151
        %s153 = smul.u32 2, %s23
        %s154 = smul.u32 2, %s23
        %v155 = vld [vmem:[%s134] sm:$0xff]
        %v156 = vld [vmem:[%s134 + $0x8] sm:$0xff]
        %vm157 = vcmask 64512
        %v158 = vsel %vm157, %v155, 0.0
        %v159 = vrot.slane %v158, 4
        %v160 = vadd.f32 %v158, %v159
        %v161 = vrot.slane %v160, 2
        %v162 = vadd.f32 %v160, %v161
        %v163 = vrot.slane %v162, 1
        %v164 = vadd.f32 %v162, %v163
        %v165 = vsel %vm157, %v156, 0.0
        %v166 = vrot.slane %v165, 4
        %v167 = vadd.f32 %v165, %v166
        %v168 = vrot.slane %v167, 2
        %v169 = vadd.f32 %v167, %v168
        %v170 = vrot.slane %v169, 1
        %v171 = vadd.f32 %v169, %v170
        %v172 = vrcp.pop 8.0
        %v173 = vmul.f32 %v164, %v172
        %v174 = vmul.f32 %v171, %v172
        %v175 = vsub.f32 %v155, %v173
        %v176 = vsub.f32 %v156, %v174
        %177 = vxpose.xlu0.b32.start [1/16] %v175, 128
        %178 = vxpose.xlu0.b32.cont [2/16] 0.0, 128
        %179 = vxpose.xlu0.b32.cont [3/16] 0.0, 128
        %180 = vxpose.xlu0.b32.cont [4/16] 0.0, 128
        %181 = vxpose.xlu0.b32.cont [5/16] 0.0, 128
        %182 = vxpose.xlu0.b32.cont [6/16] 0.0, 128
        %183 = vxpose.xlu0.b32.cont [7/16] 0.0, 128
        %184 = vxpose.xlu0.b32.cont [8/16] 0.0, 128
        %185 = vxpose.xlu0.b32.cont [9/16] 0.0, 128
        %186 = vxpose.xlu0.b32.cont [10/16] 0.0, 128
        %187 = vxpose.xlu0.b32.cont [11/16] 0.0, 128
        %188 = vxpose.xlu0.b32.cont [12/16] 0.0, 128
        %189 = vxpose.xlu0.b32.cont [13/16] 0.0, 128
        %190 = vxpose.xlu0.b32.cont [14/16] 0.0, 128
        %191 = vxpose.xlu0.b32.cont [15/16] 0.0, 128
        %192 = vxpose.xlu0.b32.end [16/16] 0.0, 128
        %v193 = vpop.trf.xlu0
        %v194 = vpop.trf.xlu0
        %v195 = vpop.trf.xlu0
        %v196 = vpop.trf.xlu0
        %v197 = vpop.trf.xlu0
        %v198 = vpop.trf.xlu0
        %v199 = vpop.trf.xlu0
        %v200 = vpop.trf.xlu0
        %v201 = vpop.trf.xlu0
        %v202 = vpop.trf.xlu0
        %v203 = vpop.trf.xlu0
        %v204 = vpop.trf.xlu0
        %v205 = vpop.trf.xlu0
        %v206 = vpop.trf.xlu0
        %v207 = vpop.trf.xlu0
        %v208 = vpop.trf.xlu0
        %v210 = vsel %vm157, %v193, 0
        %212 = vmatprep.subr.mxu0 0.0
        %213 = vmatpush1.msra.mxu0 0.0
        %214 = vmatprep.subr.mxu0 0.0
        %215 = vmatpush1.msra.mxu0 0.0
        %216 = vmatprep.subr.mxu0 0.0
        %217 = vmatpush1.msra.mxu0 0.0
        %218 = vmatprep.subr.mxu0 0.0
        %219 = vmatpush1.msra.mxu0 0.0
        %220 = vmatprep.subr.mxu0 0.0
        %221 = vmatpush1.msra.mxu0 0.0
        %222 = vmatprep.subr.mxu0 0.0
        %223 = vmatpush1.msra.mxu0 0.0
        %224 = vmatprep.subr.mxu0 0.0
        %225 = vmatpush1.msra.mxu0 0.0
        %226 = vmatprep.subr.mxu0 0.0
        %227 = vmatpush1.msra.mxu0 0.0
        %228 = vmatprep.subr.mxu0 0.0
        %229 = vmatpush1.msra.mxu0 0.0
        %230 = vmatprep.subr.mxu0 0.0
        %231 = vmatpush1.msra.mxu0 0.0
        %232 = vmatprep.subr.mxu0 0.0
        %233 = vmatpush1.msra.mxu0 0.0
        %234 = vmatprep.subr.mxu0 0.0
        %235 = vmatpush1.msra.mxu0 0.0
        %236 = vmatprep.subr.mxu0 0.0
        %237 = vmatpush1.msra.mxu0 0.0
        %238 = vmatprep.subr.mxu0 0.0
        %239 = vmatpush1.msra.mxu0 0.0
        %240 = vmatprep.subr.mxu0 0.0
        %241 = vmatpush1.msra.mxu0 0.0
        %242 = vmatprep.subr.mxu0 0.0
        %243 = vmatpush1.msra.mxu0 %v175
        %244 = vmatprep.subr.mxu0 0.0
        %245 = vmatpush2.msra.mxu0 0.0
        %246 = vmatprep.subr.mxu0 0.0
        %247 = vmatpush2.msra.mxu0 0.0
        %248 = vmatprep.subr.mxu0 0.0
        %249 = vmatpush2.msra.mxu0 0.0
        %250 = vmatprep.subr.mxu0 0.0
        %251 = vmatpush2.msra.mxu0 0.0
        %252 = vmatprep.subr.mxu0 0.0
        %253 = vmatpush2.msra.mxu0 0.0
        %254 = vmatprep.subr.mxu0 0.0
        %255 = vmatpush2.msra.mxu0 0.0
        %256 = vmatprep.subr.mxu0 0.0
        %257 = vmatpush2.msra.mxu0 0.0
        %258 = vmatprep.subr.mxu0 0.0
        %259 = vmatpush2.msra.mxu0 0.0
        %260 = vmatprep.subr.mxu0 0.0
        %261 = vmatpush2.msra.mxu0 0.0
        %262 = vmatprep.subr.mxu0 0.0
        %263 = vmatpush2.msra.mxu0 0.0
        %264 = vmatprep.subr.mxu0 0.0
        %265 = vmatpush2.msra.mxu0 0.0
        %266 = vmatprep.subr.mxu0 0.0
        %267 = vmatpush2.msra.mxu0 0.0
        %268 = vmatprep.subr.mxu0 0.0
        %269 = vmatpush2.msra.mxu0 0.0
        %270 = vmatprep.subr.mxu0 0.0
        %271 = vmatpush2.msra.mxu0 0.0
        %272 = vmatprep.subr.mxu0 0.0
        %273 = vmatpush2.msra.mxu0 0.0
        %274 = vmatprep.subr.mxu0 0.0
        %275 = vmatpush2.msra.mxu0 0.0
        %276 = vmatprep.mubr.f32.mxu0 0.0
        %277 = vmatmul.mubr.f32.gmra.mxu0 %v210
        %v278 = vpop.f32.mrf.mxu0
        %v279 = vadd.f32 0.0, %v278
        %v280 = vpop.f32.mrf.mxu0
        %281 = vdwg.mxu0
        %282 = vxpose.xlu0.b32.start [1/16] %v176, 128
        %283 = vxpose.xlu0.b32.cont [2/16] 0.0, 128
        %284 = vxpose.xlu0.b32.cont [3/16] 0.0, 128
        %285 = vxpose.xlu0.b32.cont [4/16] 0.0, 128
        %286 = vxpose.xlu0.b32.cont [5/16] 0.0, 128
        %287 = vxpose.xlu0.b32.cont [6/16] 0.0, 128
        %288 = vxpose.xlu0.b32.cont [7/16] 0.0, 128
        %289 = vxpose.xlu0.b32.cont [8/16] 0.0, 128
        %290 = vxpose.xlu0.b32.cont [9/16] 0.0, 128
        %291 = vxpose.xlu0.b32.cont [10/16] 0.0, 128
        %292 = vxpose.xlu0.b32.cont [11/16] 0.0, 128
        %293 = vxpose.xlu0.b32.cont [12/16] 0.0, 128
        %294 = vxpose.xlu0.b32.cont [13/16] 0.0, 128
        %295 = vxpose.xlu0.b32.cont [14/16] 0.0, 128
        %296 = vxpose.xlu0.b32.cont [15/16] 0.0, 128
        %297 = vxpose.xlu0.b32.end [16/16] 0.0, 128
        %v298 = vpop.trf.xlu0
        %v299 = vpop.trf.xlu0
        %v300 = vpop.trf.xlu0
        %v301 = vpop.trf.xlu0
        %v302 = vpop.trf.xlu0
        %v303 = vpop.trf.xlu0
        %v304 = vpop.trf.xlu0
        %v305 = vpop.trf.xlu0
        %v306 = vpop.trf.xlu0
        %v307 = vpop.trf.xlu0
        %v308 = vpop.trf.xlu0
        %v309 = vpop.trf.xlu0
        %v310 = vpop.trf.xlu0
        %v311 = vpop.trf.xlu0
        %v312 = vpop.trf.xlu0
        %v313 = vpop.trf.xlu0
        %v315 = vsel %vm157, %v298, 0
        %317 = vmatprep.subr.mxu0 0.0
        %318 = vmatpush1.msra.mxu0 0.0
        %319 = vmatprep.subr.mxu0 0.0
        %320 = vmatpush1.msra.mxu0 0.0
        %321 = vmatprep.subr.mxu0 0.0
        %322 = vmatpush1.msra.mxu0 0.0
        %323 = vmatprep.subr.mxu0 0.0
        %324 = vmatpush1.msra.mxu0 0.0
        %325 = vmatprep.subr.mxu0 0.0
        %326 = vmatpush1.msra.mxu0 0.0
        %327 = vmatprep.subr.mxu0 0.0
        %328 = vmatpush1.msra.mxu0 0.0
        %329 = vmatprep.subr.mxu0 0.0
        %330 = vmatpush1.msra.mxu0 0.0
        %331 = vmatprep.subr.mxu0 0.0
        %332 = vmatpush1.msra.mxu0 0.0
        %333 = vmatprep.subr.mxu0 0.0
        %334 = vmatpush1.msra.mxu0 0.0
        %335 = vmatprep.subr.mxu0 0.0
        %336 = vmatpush1.msra.mxu0 0.0
        %337 = vmatprep.subr.mxu0 0.0
        %338 = vmatpush1.msra.mxu0 0.0
        %339 = vmatprep.subr.mxu0 0.0
        %340 = vmatpush1.msra.mxu0 0.0
        %341 = vmatprep.subr.mxu0 0.0
        %342 = vmatpush1.msra.mxu0 0.0
        %343 = vmatprep.subr.mxu0 0.0
        %344 = vmatpush1.msra.mxu0 0.0
        %345 = vmatprep.subr.mxu0 0.0
        %346 = vmatpush1.msra.mxu0 0.0
        %347 = vmatprep.subr.mxu0 0.0
        %348 = vmatpush1.msra.mxu0 %v176
        %349 = vmatprep.subr.mxu0 0.0
        %350 = vmatpush2.msra.mxu0 0.0
        %351 = vmatprep.subr.mxu0 0.0
        %352 = vmatpush2.msra.mxu0 0.0
        %353 = vmatprep.subr.mxu0 0.0
        %354 = vmatpush2.msra.mxu0 0.0
        %355 = vmatprep.subr.mxu0 0.0
        %356 = vmatpush2.msra.mxu0 0.0
        %357 = vmatprep.subr.mxu0 0.0
        %358 = vmatpush2.msra.mxu0 0.0
        %359 = vmatprep.subr.mxu0 0.0
        %360 = vmatpush2.msra.mxu0 0.0
        %361 = vmatprep.subr.mxu0 0.0
        %362 = vmatpush2.msra.mxu0 0.0
        %363 = vmatprep.subr.mxu0 0.0
        %364 = vmatpush2.msra.mxu0 0.0
        %365 = vmatprep.subr.mxu0 0.0
        %366 = vmatpush2.msra.mxu0 0.0
        %367 = vmatprep.subr.mxu0 0.0
        %368 = vmatpush2.msra.mxu0 0.0
        %369 = vmatprep.subr.mxu0 0.0
        %370 = vmatpush2.msra.mxu0 0.0
        %371 = vmatprep.subr.mxu0 0.0
        %372 = vmatpush2.msra.mxu0 0.0
        %373 = vmatprep.subr.mxu0 0.0
        %374 = vmatpush2.msra.mxu0 0.0
        %375 = vmatprep.subr.mxu0 0.0
        %376 = vmatpush2.msra.mxu0 0.0
        %377 = vmatprep.subr.mxu0 0.0
        %378 = vmatpush2.msra.mxu0 0.0
        %379 = vmatprep.subr.mxu0 0.0
        %380 = vmatpush2.msra.mxu0 0.0
        %381 = vmatprep.mubr.f32.mxu0 0.0
        %382 = vmatmul.mubr.f32.gmra.mxu0 %v315
        %v383 = vpop.f32.mrf.mxu0
        %v384 = vadd.f32 0.0, %v383
        %v385 = vpop.f32.mrf.mxu0
        %386 = vdwg.mxu0
        %v387 = vmul.f32 %v279, 0.14285715
        %v388 = vmul.f32 %v384, 0.14285715
        %389 = vst.msk [vmem:[%s152] sm:$0xff] %vm157, %v387
        %390 = vst.msk [vmem:[%s152 + $0x8] sm:$0xff] %vm157, %v388
        %s391 = sand.u32 %s68, 1
        %s392 = scalar_lea.sflag [#allocation4], %s391
        %s393 = sand.u32 %s68, 1
        %s394 = smul.addr %s393, 16
        %s395 = scalar_lea.vmem [#allocation5], %s394
        // Predicated region
        $region29: #{tpu_custom_call.1} parent=23 // pred_check
          %p396 = pneg %p78
        $region30: #{tpu_custom_call.1} parent=23 // pred_check_branch
          %398 = sbr.rel (%p396) target = $region32
        $region31: #{tpu_custom_call.1} parent=23 // pred_region
          %s399 = smul.u32 2, %s23
          %s401 = ssub.s32 256, 256
          %402 = vsyncadd %s392, %s401
          %s403 = smul.addr %s22, 2
          %s404 = sadd.s32 %s399, %s403
          %s405 = smul.addr %s404, 128
          %s406 = scalar_lea.hbm %s1, %s405
          %s407 = sshll.u32 %s395, 4
          %s408 = int_to_ptr.vmem [resolvable:$true] %s407
          %413 = dma.vmem_to_hbm [thread:$0]  %s408, 256, %s406, %s392, 128, 128, 8
        $region32: #{tpu_custom_call.1} parent=23 // pred_fallthru
          _
      $region24: #{tpu_custom_call.1} parent=5 // pred_fallthru
        _
      %p414 = scmp.le.s32.totalorder 2, %s13
      // Predicated region
      $region33: #{tpu_custom_call.1} parent=5 // pred_check
        %p415 = pneg %p414
      $region34: #{tpu_custom_call.1} parent=5 // pred_check_branch
        %417 = sbr.rel (%p415) target = $region36
      $region35: #{tpu_custom_call.1} parent=5 // pred_region
        %s418 = ssub.s32 %s13, 2
        // Predicated region
        $region37: #{tpu_custom_call.1} parent=35 // pred_check
          %p419 = pneg %p84
        $region38: #{tpu_custom_call.1} parent=35 // pred_check_branch
          %421 = sbr.rel (%p419) target = $region40
        $region39: #{tpu_custom_call.1} parent=35 // pred_region
          %s422 = sand.u32 %s69, 1
          %s423 = scalar_lea.sflag [#allocation4], %s422
          %s424 = sand.u32 %s69, 1
          %s425 = smul.addr %s424, 16
          %s426 = scalar_lea.vmem [#allocation5], %s425
          %427 = dma.done %s423, 256
        $region40: #{tpu_custom_call.1} parent=35 // pred_fallthru
          _
      $region36: #{tpu_custom_call.1} parent=5 // pred_fallthru
        _
    $region6: #{tpu_custom_call.1} parent=1 // loop_footer
      %s17 = sadd.s32 1, %s13
    $region7: #{tpu_custom_call.1} parent=1 // loop_footer_branch
      %12 = sbr.rel target = $region3
    $region8: #{tpu_custom_call.1} parent=1 // loop_exit
      _
    %428 = vsyncpa [#allocation3], 1
    %s429 = scalar_lea.sflag [#allocation3], 1
    %430 = vsyncpa %s429, 1
    %431 = vsyncpa [#allocation4], 1
    %s432 = scalar_lea.sflag [#allocation4], 1
    %433 = vsyncpa %s432, 1

</llo_original>
